<compile_context>
chip_gen: v5e
topology: v5e:2x2
jax: 0.10.0
libtpu: 0.0.40
codegen_flags: <defaults>
</compile_context>

<pallas_src>
import functools

import jax
import jax.numpy as jnp
from jax.experimental import pallas as pl
from jax.experimental.pallas import tpu as pltpu


def _round_up(x: int, m: int) -> int:
    return ((x + m - 1) // m) * m


def _vmem_limit_bytes() -> int:
    """Generation-aware VMEM cap: ~3/4 of per-core capacity, at most 100 MiB."""
    try:
        cap = int(pltpu.get_tpu_info().vmem_capacity_bytes)
    except Exception:
        cap = 64 * 1024 * 1024  # conservative fallback: v7x physical per-TC VMEM
    return int(min((cap * 3) // 4, 100 * 1024 * 1024))


def shallow_ae_kernel(x_ref,
                      w1_ref, b1_ref,   # encoder layer 1: n_in       -> n_hidden
                      w2_ref, b2_ref,   # encoder layer 2: n_hidden   -> bottleneck
                      w3_ref, b3_ref,   # decoder layer 1: bottleneck -> n_hidden
                      w4_ref, b4_ref,   # decoder layer 2: n_hidden   -> n_in
                      o_ref):
    # MXU operands use the weight storage dtype (bf16 by default, f32 optional);
    # accumulation and all VPU elementwise work (bias add, ReLU) stay in f32.
    mxu_dtype = w1_ref.dtype
    x = x_ref[...].astype(mxu_dtype)

    # --- Encoder: (Linear, ReLU) x2 ---
    h = jnp.dot(x, w1_ref[...], preferred_element_type=jnp.float32) + b1_ref[...]
    h = jnp.maximum(h, 0.0)
    z = jnp.dot(h.astype(mxu_dtype), w2_ref[...],
                preferred_element_type=jnp.float32) + b2_ref[...]
    z = jnp.maximum(z, 0.0)

    # --- Decoder: (ReLU, Linear) x2 ---
    # The decoder's leading ReLU is idempotent after z's ReLU, so it is elided.
    d = jnp.dot(z.astype(mxu_dtype), w3_ref[...],
                preferred_element_type=jnp.float32) + b3_ref[...]
    d = jnp.maximum(d, 0.0)
    out = jnp.dot(d.astype(mxu_dtype), w4_ref[...],
                  preferred_element_type=jnp.float32) + b4_ref[...]

    o_ref[...] = out.astype(o_ref.dtype)


def prepare_params(params, mxu_dtype=jnp.bfloat16):
    """Cast/shape parameters ONCE, outside the per-call path.

    Weights w1..w4 stored [in, out] in the MXU operand dtype; biases b1..b4 stored
    [1, out] in f32 (bias add + ReLU run on the VPU in f32).
    """
    prepared = {}
    for i in range(1, 5):
        prepared[f"w{i}"] = jnp.asarray(params[f"w{i}"], mxu_dtype)
        prepared[f"b{i}"] = jnp.asarray(params[f"b{i}"], jnp.float32).reshape(1, -1)
    return prepared


@functools.partial(jax.jit, static_argnames=("tile_b_max",))
def shallow_ae_forward(x, prepared, *, tile_b_max: int = 1024):
    """x: [B, n_in].  prepared: output of prepare_params (w [in,out], b [1,out])."""
    B, n_in = x.shape
    n_hidden = prepared["w1"].shape[1]
    bottleneck = prepared["w2"].shape[1]

    # --- Batch tiling ---------------------------------------------------------
    # Balance the last block (avoid ~2x pad waste for awkward batch sizes) and make
    # sure there are >= 2 grid steps whenever B >= 16 so v7x's two TensorCores both
    # get work on the "parallel" batch axis (no-op on single-TC v5e/v6e).
    tile_cap = max(8, _round_up(min(tile_b_max, B), 8))
    steps = pl.cdiv(B, tile_cap)
    if B >= 16:
        steps = max(steps, 2)
    tile_b = _round_up(pl.cdiv(B, steps), 8)     # always a multiple of 8
    steps = pl.cdiv(B, tile_b)
    B_p = steps * tile_b

    # Only copy x when batch padding is actually needed; feature dims stay at their
    # true size (no 4x lane inflation of x/out HBM streaming when n_in << 128).
    if B_p != B:
        x_p = jnp.zeros((B_p, n_in), x.dtype).at[:B, :].set(x)
    else:
        x_p = x

    grid = (steps,)

    # x / out march over the batch grid; weights and biases stay VMEM-resident
    # (constant block index -> fetched once, no per-step DMA).
    x_spec = pl.BlockSpec((tile_b, n_in), lambda i: (i, 0))
    out_spec = pl.BlockSpec((tile_b, n_in), lambda i: (i, 0))

    def resident(arr):
        return pl.BlockSpec(arr.shape, lambda i: (0, 0))

    weights = (prepared["w1"], prepared["b1"], prepared["w2"], prepared["b2"],
               prepared["w3"], prepared["b3"], prepared["w4"], prepared["b4"])
    in_specs = [x_spec] + [resident(a) for a in weights]

    flops = 2 * B_p * (n_in * n_hidden + n_hidden * bottleneck
                       + bottleneck * n_hidden + n_hidden * n_in)
    bytes_accessed = int(x_p.size * x_p.dtype.itemsize
                         + B_p * n_in * jnp.dtype(x.dtype).itemsize
                         + sum(a.size * a.dtype.itemsize for a in weights))
    cost = pl.CostEstimate(flops=flops, transcendentals=0,
                           bytes_accessed=bytes_accessed)

    out_p = pl.pallas_call(
        shallow_ae_kernel,
        out_shape=jax.ShapeDtypeStruct((B_p, n_in), x.dtype),
        grid=grid,
        in_specs=in_specs,
        out_specs=out_spec,
        compiler_params=pltpu.CompilerParams(
            dimension_semantics=("parallel",),   # batch axis independent -> megacore
            vmem_limit_bytes=_vmem_limit_bytes(),
        ),
        cost_estimate=cost,
    )(x_p, *weights)

    if B_p != B:
        out_p = out_p[:B, :]
    return out_p


def init_params(key, n_in, n_hidden, bottleneck):
    """Deterministic synthetic parameters (PyTorch-style uniform fan-in init)."""
    def linear(k, fan_in, fan_out):
        kw, kb = jax.random.split(k)
        bound = 1.0 / jnp.sqrt(fan_in)
        w = jax.random.uniform(kw, (fan_in, fan_out), jnp.float32, -bound, bound)
        b = jax.random.uniform(kb, (1, fan_out), jnp.float32, -bound, bound)
        return w, b

    k1, k2, k3, k4 = jax.random.split(key, 4)
    w1, b1 = linear(k1, n_in, n_hidden)        # encoder Linear 1
    w2, b2 = linear(k2, n_hidden, bottleneck)  # encoder Linear 2
    w3, b3 = linear(k3, bottleneck, n_hidden)  # decoder Linear 1
    w4, b4 = linear(k4, n_hidden, n_in)        # decoder Linear 2
    return dict(w1=w1, b1=b1, w2=w2, b2=b2, w3=w3, b3=b3, w4=w4, b4=b4)


def shallow_ae_ref(x, p, mxu_dtype=jnp.float32):
    """Pure-JAX reference matching the PyTorch module semantics (optionally with the
    same MXU-operand casting as the kernel)."""
    def lin(a, w, b):
        return jnp.dot(a.astype(mxu_dtype), w.astype(mxu_dtype),
                       preferred_element_type=jnp.float32) + b
    h = jnp.maximum(lin(x, p["w1"], p["b1"]), 0.0)           # encoder: Linear, ReLU
    z = jnp.maximum(lin(h, p["w2"], p["b2"]), 0.0)           # encoder: Linear, ReLU
    d = jnp.maximum(lin(jnp.maximum(z, 0.0), p["w3"], p["b3"]), 0.0)  # decoder: ReLU, Linear, (next ReLU)
    return lin(d, p["w4"], p["b4"])                          # decoder: ReLU, Linear


if __name__ == "__main__":
    # Small shapes consistent with ShallowAE(n_in, n_hidden, bottleneck)
    n_in, n_hidden, bottleneck = 32, 64, 16

    key = jax.random.PRNGKey(0)
    kx1, kx2, kp = jax.random.split(key, 3)
    params = init_params(kp, n_in, n_hidden, bottleneck)

    # 1) exact-semantics f32 path; batch divides the tile -> no wrapper copy, grid=(1,)
    x1 = jax.random.normal(kx1, (8, n_in), dtype=jnp.float32)
    p_f32 = prepare_params(params, mxu_dtype=jnp.float32)
    out_f32 = jax.block_until_ready(shallow_ae_forward(x1, p_f32))
    ref_f32 = shallow_ae_ref(x1, params, mxu_dtype=jnp.float32)
    assert out_f32.shape == (8, n_in)
    assert jnp.allclose(out_f32, ref_f32, atol=1e-4, rtol=1e-4), "f32 mismatch vs reference"

    # 2) default bf16 MXU-operand path; batch needing padding and a 2-step grid
    x2 = jax.random.normal(kx2, (20, n_in), dtype=jnp.float32)
    p_bf16 = prepare_params(params)                       # default: bf16 MXU operands
    out_bf16 = jax.block_until_ready(shallow_ae_forward(x2, p_bf16))
    ref_bf16 = shallow_ae_ref(x2, params, mxu_dtype=jnp.bfloat16)
    assert out_bf16.shape == (20, n_in)
    assert jnp.allclose(out_bf16, ref_bf16, atol=2e-2, rtol=2e-2), "bf16 mismatch vs reference"

    print("KERNEL_OK")
</pallas_src>

<mosaic_0001>
module attributes {stable_mosaic.version = 11 : i64} {
  func.func @shallow_ae_kernel(%arg0: i32, %arg1: memref<8x32xf32, #tpu.memory_space<vmem>>, %arg2: memref<32x64xf32, #tpu.memory_space<vmem>>, %arg3: memref<1x64xf32, #tpu.memory_space<vmem>>, %arg4: memref<64x16xf32, #tpu.memory_space<vmem>>, %arg5: memref<1x16xf32, #tpu.memory_space<vmem>>, %arg6: memref<16x64xf32, #tpu.memory_space<vmem>>, %arg7: memref<1x64xf32, #tpu.memory_space<vmem>>, %arg8: memref<64x32xf32, #tpu.memory_space<vmem>>, %arg9: memref<1x32xf32, #tpu.memory_space<vmem>>, %arg10: memref<8x32xf32, #tpu.memory_space<vmem>>) attributes {dimension_semantics = [#tpu.dimension_semantics<parallel>], iteration_bounds = array<i64: 1>, scalar_prefetch = 0 : i64, scratch_operands = 0 : i64, tpu.core_type = #tpu.core_type<tc>, window_params = [{transform_indices = @transform_0, window_bounds = array<i64: 8, 32>}, {pipeline_mode = #tpu.pipeline_mode<synchronous>, transform_indices = @transform_1, window_bounds = array<i64: 32, 64>}, {pipeline_mode = #tpu.pipeline_mode<synchronous>, transform_indices = @transform_2, window_bounds = array<i64: 1, 64>}, {pipeline_mode = #tpu.pipeline_mode<synchronous>, transform_indices = @transform_3, window_bounds = array<i64: 64, 16>}, {pipeline_mode = #tpu.pipeline_mode<synchronous>, transform_indices = @transform_4, window_bounds = array<i64: 1, 16>}, {pipeline_mode = #tpu.pipeline_mode<synchronous>, transform_indices = @transform_5, window_bounds = array<i64: 16, 64>}, {pipeline_mode = #tpu.pipeline_mode<synchronous>, transform_indices = @transform_6, window_bounds = array<i64: 1, 64>}, {pipeline_mode = #tpu.pipeline_mode<synchronous>, transform_indices = @transform_7, window_bounds = array<i64: 64, 32>}, {pipeline_mode = #tpu.pipeline_mode<synchronous>, transform_indices = @transform_8, window_bounds = array<i64: 1, 32>}, {transform_indices = @transform_9, window_bounds = array<i64: 8, 32>}]} {
    %c0 = arith.constant 0 : index
    %c0_0 = arith.constant 0 : index
    %0 = vector.load %arg1[%c0, %c0_0] : memref<8x32xf32, #tpu.memory_space<vmem>>, vector<8x32xf32>
    %c0_1 = arith.constant 0 : index
    %c0_2 = arith.constant 0 : index
    %1 = vector.load %arg2[%c0_1, %c0_2] : memref<32x64xf32, #tpu.memory_space<vmem>>, vector<32x64xf32>
    %cst = arith.constant dense<0.000000e+00> : vector<8x64xf32>
    %2 = tpu.matmul %0, %1, %cst {dimension_numbers = #tpu.dot_dimension_numbers<[1], [0], [0], [1], [0, 0, 1, 1], [], []>} : vector<8x32xf32>, vector<32x64xf32>, vector<8x64xf32> -> vector<8x64xf32>
    %c0_3 = arith.constant 0 : index
    %c0_4 = arith.constant 0 : index
    %3 = vector.load %arg3[%c0_3, %c0_4] : memref<1x64xf32, #tpu.memory_space<vmem>>, vector<1x64xf32>
    %4 = vector.broadcast %3 : vector<1x64xf32> to vector<8x64xf32>
    %5 = arith.addf %2, %4 : vector<8x64xf32>
    %cst_5 = arith.constant 0.000000e+00 : f32
    %6 = vector.broadcast %cst_5 : f32 to vector<8x64xf32>
    %7 = arith.maximumf %5, %6 : vector<8x64xf32>
    %c0_6 = arith.constant 0 : index
    %c0_7 = arith.constant 0 : index
    %8 = vector.load %arg4[%c0_6, %c0_7] : memref<64x16xf32, #tpu.memory_space<vmem>>, vector<64x16xf32>
    %cst_8 = arith.constant dense<0.000000e+00> : vector<8x16xf32>
    %9 = tpu.matmul %7, %8, %cst_8 {dimension_numbers = #tpu.dot_dimension_numbers<[1], [0], [0], [1], [0, 0, 1, 1], [], []>} : vector<8x64xf32>, vector<64x16xf32>, vector<8x16xf32> -> vector<8x16xf32>
    %c0_9 = arith.constant 0 : index
    %c0_10 = arith.constant 0 : index
    %10 = vector.load %arg5[%c0_9, %c0_10] : memref<1x16xf32, #tpu.memory_space<vmem>>, vector<1x16xf32>
    %11 = vector.broadcast %10 : vector<1x16xf32> to vector<8x16xf32>
    %12 = arith.addf %9, %11 : vector<8x16xf32>
    %cst_11 = arith.constant 0.000000e+00 : f32
    %13 = vector.broadcast %cst_11 : f32 to vector<8x16xf32>
    %14 = arith.maximumf %12, %13 : vector<8x16xf32>
    %c0_12 = arith.constant 0 : index
    %c0_13 = arith.constant 0 : index
    %15 = vector.load %arg6[%c0_12, %c0_13] : memref<16x64xf32, #tpu.memory_space<vmem>>, vector<16x64xf32>
    %cst_14 = arith.constant dense<0.000000e+00> : vector<8x64xf32>
    %16 = tpu.matmul %14, %15, %cst_14 {dimension_numbers = #tpu.dot_dimension_numbers<[1], [0], [0], [1], [0, 0, 1, 1], [], []>} : vector<8x16xf32>, vector<16x64xf32>, vector<8x64xf32> -> vector<8x64xf32>
    %c0_15 = arith.constant 0 : index
    %c0_16 = arith.constant 0 : index
    %17 = vector.load %arg7[%c0_15, %c0_16] : memref<1x64xf32, #tpu.memory_space<vmem>>, vector<1x64xf32>
    %18 = vector.broadcast %17 : vector<1x64xf32> to vector<8x64xf32>
    %19 = arith.addf %16, %18 : vector<8x64xf32>
    %cst_17 = arith.constant 0.000000e+00 : f32
    %20 = vector.broadcast %cst_17 : f32 to vector<8x64xf32>
    %21 = arith.maximumf %19, %20 : vector<8x64xf32>
    %c0_18 = arith.constant 0 : index
    %c0_19 = arith.constant 0 : index
    %22 = vector.load %arg8[%c0_18, %c0_19] : memref<64x32xf32, #tpu.memory_space<vmem>>, vector<64x32xf32>
    %cst_20 = arith.constant dense<0.000000e+00> : vector<8x32xf32>
    %23 = tpu.matmul %21, %22, %cst_20 {dimension_numbers = #tpu.dot_dimension_numbers<[1], [0], [0], [1], [0, 0, 1, 1], [], []>} : vector<8x64xf32>, vector<64x32xf32>, vector<8x32xf32> -> vector<8x32xf32>
    %c0_21 = arith.constant 0 : index
    %c0_22 = arith.constant 0 : index
    %24 = vector.load %arg9[%c0_21, %c0_22] : memref<1x32xf32, #tpu.memory_space<vmem>>, vector<1x32xf32>
    %25 = vector.broadcast %24 : vector<1x32xf32> to vector<8x32xf32>
    %26 = arith.addf %23, %25 : vector<8x32xf32>
    %c0_23 = arith.constant 0 : index
    %c0_24 = arith.constant 0 : index
    %27 = vector.load %arg10[%c0_23, %c0_24] : memref<8x32xf32, #tpu.memory_space<vmem>>, vector<8x32xf32>
    tpu.vector_store %arg10[%c0_23, %c0_24], %26 {strides = array<i32>} : memref<8x32xf32, #tpu.memory_space<vmem>>, vector<8x32xf32>,
    return
  }
  func.func @transform_0(%arg0: i32) -> (i32, i32) {
    %c0_i32 = arith.constant 0 : i32
    %c0_i32_0 = arith.constant 0 : i32
    return %arg0, %c0_i32 : i32, i32
  }
  func.func @transform_1(%arg0: i32) -> (i32, i32) {
    %c0_i32 = arith.constant 0 : i32
    %c0_i32_0 = arith.constant 0 : i32
    %c0_i32_1 = arith.constant 0 : i32
    return %c0_i32, %c0_i32_0 : i32, i32
  }
  func.func @transform_2(%arg0: i32) -> (i32, i32) {
    %c0_i32 = arith.constant 0 : i32
    %c0_i32_0 = arith.constant 0 : i32
    %c0_i32_1 = arith.constant 0 : i32
    return %c0_i32, %c0_i32_0 : i32, i32
  }
  func.func @transform_3(%arg0: i32) -> (i32, i32) {
    %c0_i32 = arith.constant 0 : i32
    %c0_i32_0 = arith.constant 0 : i32
    %c0_i32_1 = arith.constant 0 : i32
    return %c0_i32, %c0_i32_0 : i32, i32
  }
  func.func @transform_4(%arg0: i32) -> (i32, i32) {
    %c0_i32 = arith.constant 0 : i32
    %c0_i32_0 = arith.constant 0 : i32
    %c0_i32_1 = arith.constant 0 : i32
    return %c0_i32, %c0_i32_0 : i32, i32
  }
  func.func @transform_5(%arg0: i32) -> (i32, i32) {
    %c0_i32 = arith.constant 0 : i32
    %c0_i32_0 = arith.constant 0 : i32
    %c0_i32_1 = arith.constant 0 : i32
    return %c0_i32, %c0_i32_0 : i32, i32
  }
  func.func @transform_6(%arg0: i32) -> (i32, i32) {
    %c0_i32 = arith.constant 0 : i32
    %c0_i32_0 = arith.constant 0 : i32
    %c0_i32_1 = arith.constant 0 : i32
    return %c0_i32, %c0_i32_0 : i32, i32
  }
  func.func @transform_7(%arg0: i32) -> (i32, i32) {
    %c0_i32 = arith.constant 0 : i32
    %c0_i32_0 = arith.constant 0 : i32
    %c0_i32_1 = arith.constant 0 : i32
    return %c0_i32, %c0_i32_0 : i32, i32
  }
  func.func @transform_8(%arg0: i32) -> (i32, i32) {
    %c0_i32 = arith.constant 0 : i32
    %c0_i32_0 = arith.constant 0 : i32
    %c0_i32_1 = arith.constant 0 : i32
    return %c0_i32, %c0_i32_0 : i32, i32
  }
  func.func @transform_9(%arg0: i32) -> (i32, i32) {
    %c0_i32 = arith.constant 0 : i32
    %c0_i32_0 = arith.constant 0 : i32
    return %arg0, %c0_i32 : i32, i32
  }
}

</mosaic_0001>

<llo_original>
// kernel: shallow_ae_forward.1
$region0: #{shallow_ae_forward.1}
  #allocation0 [shape = 'u32[]', space=smem, size = 0x4, offset = 0x4, fixed_abs, tag = 'smem constant byte address 0x4 - core index']
  #allocation1 [shape = 'u32[72,128]{1,0:T(1,128)}', space=vmem, size = 0x9000, scoped, tag = 'internal scratch']
  %s0 = inlined_call_operand.vmem [shape: f32[8,32], index: 0, kind: input, shape index: {}]
  %s1 = inlined_call_operand.vmem [shape: f32[32,64], index: 1, kind: input, shape index: {}]
  %s2 = inlined_call_operand.vmem [shape: f32[1,64], index: 2, kind: input, shape index: {}]
  %s3 = inlined_call_operand.vmem [shape: f32[64,16], index: 3, kind: input, shape index: {}]
  %s4 = inlined_call_operand.vmem [shape: f32[1,16], index: 4, kind: input, shape index: {}]
  %s5 = inlined_call_operand.vmem [shape: f32[16,64], index: 5, kind: input, shape index: {}]
  %s6 = inlined_call_operand.vmem [shape: f32[1,64], index: 6, kind: input, shape index: {}]
  %s7 = inlined_call_operand.vmem [shape: f32[64,32], index: 7, kind: input, shape index: {}]
  %s8 = inlined_call_operand.vmem [shape: f32[1,32], index: 8, kind: input, shape index: {}]
  %s9 = inlined_call_operand.hbm [shape: f32[8,32], index: 9, kind: output, shape index: {}]
  %s10 = sld [smem:[#allocation0]]
  $region46: #{shallow_ae_forward.1} parent=0
    _
  %s12 = ssub.s32 1, %s10
  %s13 = scalar_select 0, %s12, %s10
  $region1: #{shallow_ae_forward.1} parent=0
    #allocation2 [shape = 'u8[4096]{0}', space=vmem, size = 0x1000, scoped, tag = 'output window, operand 0, single buffered']
    #allocation3 [shape = 's32[1]{0}', space=sflag, size = 0x4, scoped, tag = 'scoped memory for shallow_ae_forward.1']
    %14 = vsyncpa [#allocation3], 0
    // Predicated region
    $region2: #{shallow_ae_forward.1} parent=1 // pred_check
      _
    $region3: #{shallow_ae_forward.1} parent=1 // pred_check_branch
      %16 = sbr.rel (0) target = $region5
    $region4: #{shallow_ae_forward.1} parent=1 // pred_region
      _
    $region5: #{shallow_ae_forward.1} parent=1 // pred_fallthru
      _
    // Predicated region
    $region6: #{shallow_ae_forward.1} parent=1 // pred_check
      _
    $region7: #{shallow_ae_forward.1} parent=1 // pred_check_branch
      %18 = sbr.rel (0) target = $region9
    $region8: #{shallow_ae_forward.1} parent=1 // pred_region
      _
    $region9: #{shallow_ae_forward.1} parent=1 // pred_fallthru
      _
    // Predicated region
    $region10: #{shallow_ae_forward.1} parent=1 // pred_check
      _
    $region11: #{shallow_ae_forward.1} parent=1 // pred_check_branch
      %20 = sbr.rel (0) target = $region13
    $region12: #{shallow_ae_forward.1} parent=1 // pred_region
      _
    $region13: #{shallow_ae_forward.1} parent=1 // pred_fallthru
      _
    // Predicated region
    $region14: #{shallow_ae_forward.1} parent=1 // pred_check
      _
    $region15: #{shallow_ae_forward.1} parent=1 // pred_check_branch
      %22 = sbr.rel (0) target = $region17
    $region16: #{shallow_ae_forward.1} parent=1 // pred_region
      _
    $region17: #{shallow_ae_forward.1} parent=1 // pred_fallthru
      _
    // Predicated region
    $region18: #{shallow_ae_forward.1} parent=1 // pred_check
      _
    $region19: #{shallow_ae_forward.1} parent=1 // pred_check_branch
      %24 = sbr.rel (0) target = $region21
    $region20: #{shallow_ae_forward.1} parent=1 // pred_region
      _
    $region21: #{shallow_ae_forward.1} parent=1 // pred_fallthru
      _
    // Predicated region
    $region22: #{shallow_ae_forward.1} parent=1 // pred_check
      _
    $region23: #{shallow_ae_forward.1} parent=1 // pred_check_branch
      %26 = sbr.rel (0) target = $region25
    $region24: #{shallow_ae_forward.1} parent=1 // pred_region
      _
    $region25: #{shallow_ae_forward.1} parent=1 // pred_fallthru
      _
    // Predicated region
    $region26: #{shallow_ae_forward.1} parent=1 // pred_check
      _
    $region27: #{shallow_ae_forward.1} parent=1 // pred_check_branch
      %28 = sbr.rel (0) target = $region29
    $region28: #{shallow_ae_forward.1} parent=1 // pred_region
      _
    $region29: #{shallow_ae_forward.1} parent=1 // pred_fallthru
      _
    // Predicated region
    $region30: #{shallow_ae_forward.1} parent=1 // pred_check
      _
    $region31: #{shallow_ae_forward.1} parent=1 // pred_check_branch
      %30 = sbr.rel (0) target = $region33
    $region32: #{shallow_ae_forward.1} parent=1 // pred_region
      _
    $region33: #{shallow_ae_forward.1} parent=1 // pred_fallthru
      _
    // Predicated region
    $region34: #{shallow_ae_forward.1} parent=1 // pred_check
      _
    $region35: #{shallow_ae_forward.1} parent=1 // pred_check_branch
      %32 = sbr.rel (0) target = $region37
    $region36: #{shallow_ae_forward.1} parent=1 // pred_region
      _
    $region37: #{shallow_ae_forward.1} parent=1 // pred_fallthru
      _
    %v33 = vld [vmem:[%s0] sm:$0xff]
    %v34 = vld [vmem:[%s1] sm:$0xff]
    %v35 = vld [vmem:[%s1 + $0x8] sm:$0xff]
    %v36 = vld [vmem:[%s1 + $0x10] sm:$0xff]
    %v37 = vld [vmem:[%s1 + $0x18] sm:$0xff]
    %v38 = vld [vmem:[%s2] sm:$0x1]
    %v40 = vperm.slane %v38, 0
    %vm42 = vcmask 261120
    %v44 = vsel %vm42, %v33, 0
    %46 = vmatpush.msra.mxu0 0.0
    %47 = vmatpush.msra.mxu0 0.0
    %48 = vmatpush.msra.mxu0 0.0
    %49 = vmatpush.msra.mxu0 0.0
    %50 = vmatpush.msra.mxu0 0.0
    %51 = vmatpush.msra.mxu0 0.0
    %52 = vmatpush.msra.mxu0 0.0
    %53 = vmatpush.msra.mxu0 0.0
    %54 = vmatpush.msra.mxu0 0.0
    %55 = vmatpush.msra.mxu0 0.0
    %56 = vmatpush.msra.mxu0 0.0
    %57 = vmatpush.msra.mxu0 0.0
    %58 = vmatpush.msra.mxu0 %v37
    %59 = vmatpush.msra.mxu0 %v36
    %60 = vmatpush.msra.mxu0 %v35
    %61 = vmatpush.msra.mxu0 %v34
    %62 = vmatmul.f32.gmra.mxu0 %v44
    %v63 = vpop.f32.mrf.mxu0
    %v64 = vadd.f32 %v40, %v63
    %65 = vdwg.mxu0
    %v66 = vmax.f32 %v64, 0.0
    %v67 = vld [vmem:[%s3] sm:$0xff]
    %v68 = vld [vmem:[%s3 + $0x8] sm:$0xff]
    %v69 = vld [vmem:[%s3 + $0x10] sm:$0xff]
    %v70 = vld [vmem:[%s3 + $0x18] sm:$0xff]
    %v71 = vld [vmem:[%s3 + $0x20] sm:$0xff]
    %v72 = vld [vmem:[%s3 + $0x28] sm:$0xff]
    %v73 = vld [vmem:[%s3 + $0x30] sm:$0xff]
    %v74 = vld [vmem:[%s3 + $0x38] sm:$0xff]
    %v75 = vld [vmem:[%s4] sm:$0x1]
    %v77 = vperm.slane %v75, 0
    %vm79 = vcmask 523264
    %v81 = vsel %vm79, %v66, 0
    %83 = vmatpush.msra.mxu0 0.0
    %84 = vmatpush.msra.mxu0 0.0
    %85 = vmatpush.msra.mxu0 0.0
    %86 = vmatpush.msra.mxu0 0.0
    %87 = vmatpush.msra.mxu0 0.0
    %88 = vmatpush.msra.mxu0 0.0
    %89 = vmatpush.msra.mxu0 0.0
    %90 = vmatpush.msra.mxu0 0.0
    %91 = vmatpush.msra.mxu0 %v74
    %92 = vmatpush.msra.mxu0 %v73
    %93 = vmatpush.msra.mxu0 %v72
    %94 = vmatpush.msra.mxu0 %v71
    %95 = vmatpush.msra.mxu0 %v70
    %96 = vmatpush.msra.mxu0 %v69
    %97 = vmatpush.msra.mxu0 %v68
    %98 = vmatpush.msra.mxu0 %v67
    %99 = vmatmul.f32.gmra.mxu0 %v81
    %v100 = vpop.f32.mrf.mxu0
    %v101 = vadd.f32 %v77, %v100
    %102 = vdwg.mxu0
    %v103 = vmax.f32 %v101, 0.0
    %v104 = vld [vmem:[%s5] sm:$0xff]
    %v105 = vld [vmem:[%s5 + $0x8] sm:$0xff]
    %v106 = vld [vmem:[%s6] sm:$0x1]
    %v108 = vperm.slane %v106, 0
    %vm110 = vcmask 130048
    %v112 = vsel %vm110, %v103, 0
    %114 = vmatpush.msra.mxu0 0.0
    %115 = vmatpush.msra.mxu0 0.0
    %116 = vmatpush.msra.mxu0 0.0
    %117 = vmatpush.msra.mxu0 0.0
    %118 = vmatpush.msra.mxu0 0.0
    %119 = vmatpush.msra.mxu0 0.0
    %120 = vmatpush.msra.mxu0 0.0
    %121 = vmatpush.msra.mxu0 0.0
    %122 = vmatpush.msra.mxu0 0.0
    %123 = vmatpush.msra.mxu0 0.0
    %124 = vmatpush.msra.mxu0 0.0
    %125 = vmatpush.msra.mxu0 0.0
    %126 = vmatpush.msra.mxu0 0.0
    %127 = vmatpush.msra.mxu0 0.0
    %128 = vmatpush.msra.mxu0 %v105
    %129 = vmatpush.msra.mxu0 %v104
    %130 = vmatmul.f32.gmra.mxu0 %v112
    %v131 = vpop.f32.mrf.mxu0
    %v132 = vadd.f32 %v108, %v131
    %133 = vdwg.mxu0
    %v134 = vmax.f32 %v132, 0.0
    %v135 = vld [vmem:[%s7] sm:$0xff]
    %v136 = vld [vmem:[%s7 + $0x8] sm:$0xff]
    %v137 = vld [vmem:[%s7 + $0x10] sm:$0xff]
    %v138 = vld [vmem:[%s7 + $0x18] sm:$0xff]
    %v139 = vld [vmem:[%s7 + $0x20] sm:$0xff]
    %v140 = vld [vmem:[%s7 + $0x28] sm:$0xff]
    %v141 = vld [vmem:[%s7 + $0x30] sm:$0xff]
    %v142 = vld [vmem:[%s7 + $0x38] sm:$0xff]
    %v143 = vld [vmem:[%s8] sm:$0x1]
    %v145 = vperm.slane %v143, 0
    %v148 = vsel %vm79, %v134, 0
    %150 = vmatpush.msra.mxu0 0.0
    %151 = vmatpush.msra.mxu0 0.0
    %152 = vmatpush.msra.mxu0 0.0
    %153 = vmatpush.msra.mxu0 0.0
    %154 = vmatpush.msra.mxu0 0.0
    %155 = vmatpush.msra.mxu0 0.0
    %156 = vmatpush.msra.mxu0 0.0
    %157 = vmatpush.msra.mxu0 0.0
    %158 = vmatpush.msra.mxu0 %v142
    %159 = vmatpush.msra.mxu0 %v141
    %160 = vmatpush.msra.mxu0 %v140
    %161 = vmatpush.msra.mxu0 %v139
    %162 = vmatpush.msra.mxu0 %v138
    %163 = vmatpush.msra.mxu0 %v137
    %164 = vmatpush.msra.mxu0 %v136
    %165 = vmatpush.msra.mxu0 %v135
    %166 = vmatmul.f32.gmra.mxu0 %v148
    %v167 = vpop.f32.mrf.mxu0
    %v168 = vadd.f32 %v145, %v167
    %169 = vdwg.mxu0
    %170 = vst.msk [vmem:[#allocation2] sm:$0xff] %vm42, %v168
    // Predicated region
    $region38: #{shallow_ae_forward.1} parent=1 // pred_check
      _
    $region39: #{shallow_ae_forward.1} parent=1 // pred_check_branch
      %172 = sbr.rel (0) target = $region41
    $region40: #{shallow_ae_forward.1} parent=1 // pred_region
      %174 = vsyncadd [#allocation3], 0
      %s176 = sshll.u32 [#allocation2], 4
      %s177 = int_to_ptr.vmem [resolvable:$true] %s176
      %s178 = sshll.u32 %s9, 4
      %s179 = int_to_ptr.hbm [resolvable:$true] %s178
      %181 = dma.vmem_to_hbm [thread:$0]  %s177, 128, %s179, [#allocation3]
    $region41: #{shallow_ae_forward.1} parent=1 // pred_fallthru
      _
    // Predicated region
    $region42: #{shallow_ae_forward.1} parent=1 // pred_check
      _
    $region43: #{shallow_ae_forward.1} parent=1 // pred_check_branch
      %183 = sbr.rel (0) target = $region45
    $region44: #{shallow_ae_forward.1} parent=1 // pred_region
      %185 = dma.done [#allocation3], 128
    $region45: #{shallow_ae_forward.1} parent=1 // pred_fallthru
      _
    %186 = vsyncpa [#allocation3], 1

</llo_original>
